<compile_context>
chip_gen: v5e
topology: v5e:2x2
jax: 0.10.0
libtpu: 0.0.40
codegen_flags: <defaults>
</compile_context>

<pallas_src>
import math
import jax
import jax.numpy as jnp
from jax.experimental import pallas as pl
from jax.experimental.pallas import tpu as pltpu


def _round_up(v, m):
    return ((v + m - 1) // m) * m


# ----------------------------------------------------------------------------
# Kernel body (shared by the no-grid and M-tiled entry points).
# Refs:
#   r_ref : (M_tile, r_dim)    read-vector rows
#   x_ref : (M_tile, x_dim)    external-input rows
#   wr_ref: (r_dim, n_pad)     weight columns for r   (lane-padded out dim)
#   wx_ref: (x_dim, n_pad)     weight columns for x
#   b_ref : (1, n_pad)         bias (lane-padded)
#   o_ref : (M_tile, n_pad)    output rows
# ----------------------------------------------------------------------------
def _mlp_controller_kernel(r_ref, x_ref, wr_ref, wx_ref, b_ref, o_ref):
    # Split-dot formulation of Linear(concat(r, x)): two MXU matmuls, one f32
    # accumulator, no lane-axis concatenate.
    acc = jnp.dot(r_ref[...], wr_ref[...], preferred_element_type=jnp.float32)
    acc = acc + jnp.dot(x_ref[...], wx_ref[...],
                        preferred_element_type=jnp.float32)
    o_ref[...] = (acc + b_ref[...].astype(jnp.float32)).astype(o_ref.dtype)


# ----------------------------------------------------------------------------
# One-time parameter preparation (outside any per-step loop):
#   * split the PyTorch weight (out_dim, in_dim) into the r-part and x-part,
#     transposed to (k, out) layout for `activations @ W`,
#   * zero-pad the output dimension to a multiple of `lane_multiple` (128;
#     use 256 on v6e/v7x at real sizes) so stores are lane-dense.
# ----------------------------------------------------------------------------
def prepare_controller_params(weight, bias, r_dim, *, lane_multiple=128,
                              param_dtype=None):
    out_dim, in_dim = weight.shape
    assert bias.shape == (out_dim,)
    assert 0 < r_dim < in_dim
    n_pad = _round_up(out_dim, lane_multiple)
    pad = n_pad - out_dim
    w_t = weight.T                                              # (in_dim, out_dim)
    wr = jnp.pad(w_t[:r_dim], ((0, 0), (0, pad)))               # (r_dim, n_pad)
    wx = jnp.pad(w_t[r_dim:], ((0, 0), (0, pad)))               # (x_dim, n_pad)
    b2 = jnp.pad(bias.reshape(1, out_dim), ((0, 0), (0, pad)))  # (1, n_pad)
    if param_dtype is not None:                                 # e.g. bf16 at scale
        wr, wx = wr.astype(param_dtype), wx.astype(param_dtype)
    return wr, wx, b2, out_dim


def _call_no_grid(r, x, wr, wx, bias2d, m_pad, n_pad, out_dtype):
    return pl.pallas_call(
        _mlp_controller_kernel,
        out_shape=jax.ShapeDtypeStruct((m_pad, n_pad), out_dtype),
        in_specs=[pl.BlockSpec(memory_space=pltpu.MemorySpace.VMEM)] * 5,
        out_specs=pl.BlockSpec(memory_space=pltpu.MemorySpace.VMEM),
    )(r, x, wr, wx, bias2d)


def _call_m_tiled(r, x, wr, wx, bias2d, m_pad, n_pad, tile_m, out_dtype):
    r_dim = r.shape[1]
    x_dim = x.shape[1]
    return pl.pallas_call(
        _mlp_controller_kernel,
        out_shape=jax.ShapeDtypeStruct((m_pad, n_pad), out_dtype),
        grid=(m_pad // tile_m,),
        in_specs=[
            # per-chunk activation rows stream through the pipeline
            pl.BlockSpec((tile_m, r_dim), lambda i: (i, 0)),
            pl.BlockSpec((tile_m, x_dim), lambda i: (i, 0)),
            # weights / bias: constant index_map -> VMEM-resident across chunks
            pl.BlockSpec((r_dim, n_pad), lambda i: (0, 0)),
            pl.BlockSpec((x_dim, n_pad), lambda i: (0, 0)),
            pl.BlockSpec((1, n_pad), lambda i: (0, 0)),
        ],
        out_specs=pl.BlockSpec((tile_m, n_pad), lambda i: (i, 0)),
    )(r, x, wr, wx, bias2d)


# ----------------------------------------------------------------------------
# Single-step MLPController.forward (matches the PyTorch module exactly).
# No grid; rows padded to a multiple of 8 for sublane-dense stores.
# NOTE: do NOT drive this from a Python per-timestep loop — use
# mlp_controller_forward_seq for multi-step use (weights DMA'd once).
# ----------------------------------------------------------------------------
def mlp_controller_forward(x, r, wr, wx, bias2d, *, batch_size, out_dim,
                           out_dtype=jnp.float32, return_padded=False):
    if batch_size != 1:
        x = jnp.squeeze(x, axis=0)          # glue: x.squeeze(0)
    B, r_dim = r.shape
    x_dim = x.shape[1]
    n_pad = wr.shape[1]
    assert wr.shape == (r_dim, n_pad) and wx.shape == (x_dim, n_pad)
    assert bias2d.shape == (1, n_pad)

    m_pad = _round_up(B, 8)                 # sublane-dense stores
    if m_pad != B:
        r = jnp.pad(r, ((0, m_pad - B), (0, 0)))
        x = jnp.pad(x, ((0, m_pad - B), (0, 0)))

    out_padded = _call_no_grid(r, x, wr, wx, bias2d, m_pad, n_pad, out_dtype)
    out = out_padded[:B]
    if return_padded:
        return out                          # (B, n_pad): downstream slices later
    return out[:, :out_dim]


# ----------------------------------------------------------------------------
# Fused-timestep variant: run the controller Linear for T steps in ONE
# pallas_call by flattening T*B into the matmul M dimension (valid because
# r_seq is a precomputed input — no step-to-step recurrence in this kernel).
# Small sequences: single no-grid call.  Long sequences: M tiled in tile_m
# chunks, weights stay VMEM-resident via constant index_map.
# ----------------------------------------------------------------------------
def mlp_controller_forward_seq(x_seq, r_seq, wr, wx, bias2d, *, out_dim,
                               out_dtype=jnp.float32, tile_m=512,
                               return_padded=False):
    T, B, x_dim = x_seq.shape
    T2, B2, r_dim = r_seq.shape
    assert (T, B) == (T2, B2)
    n_pad = wr.shape[1]
    assert tile_m % 8 == 0

    M = T * B
    r_flat = r_seq.reshape(M, r_dim)
    x_flat = x_seq.reshape(M, x_dim)

    if M <= tile_m:
        m_pad = _round_up(M, 8)             # sublane-dense stores
        use_grid = False
    else:
        m_pad = _round_up(M, tile_m)
        use_grid = True
    if m_pad != M:
        r_flat = jnp.pad(r_flat, ((0, m_pad - M), (0, 0)))
        x_flat = jnp.pad(x_flat, ((0, m_pad - M), (0, 0)))

    if use_grid:
        out_padded = _call_m_tiled(r_flat, x_flat, wr, wx, bias2d,
                                   m_pad, n_pad, tile_m, out_dtype)
    else:
        out_padded = _call_no_grid(r_flat, x_flat, wr, wx, bias2d,
                                   m_pad, n_pad, out_dtype)

    out = out_padded[:M].reshape(T, B, n_pad)
    if return_padded:
        return out                          # lane-padded slab for downstream
    return out[..., :out_dim]


def _xavier_uniform(key, shape, dtype=jnp.float32):
    # torch.nn.init.xavier_uniform for a 2-D weight (fan_out, fan_in).
    fan_out, fan_in = shape
    bound = math.sqrt(6.0 / (fan_in + fan_out))
    return jax.random.uniform(key, shape, dtype, minval=-bound, maxval=bound)


if __name__ == "__main__":
    # Small shapes consistent with the NTM MLP controller:
    #   num_inputs (x_dim) = 16, memory_feature_size (r_dim) = 16,
    #   controller_size (out_dim) = 32, batch = 2, T = 8 timesteps.
    batch = 2
    r_dim = 16
    x_dim = 16
    input_dim = r_dim + x_dim
    output_dim = 32
    T = 8

    key = jax.random.PRNGKey(0)
    k_w, k_b, k_x, k_r, k_xs, k_rs, k_x1, k_r1 = jax.random.split(key, 8)

    # nn.Linear(input_dim, output_dim): weight (out, in) xavier, bias normal(0.01)
    weight = _xavier_uniform(k_w, (output_dim, input_dim))
    bias = 0.01 * jax.random.normal(k_b, (output_dim,), jnp.float32)

    # One-time prep: split + transpose + lane-pad (done outside the step loop).
    wr, wx, bias2d, out_dim = prepare_controller_params(weight, bias, r_dim)

    # ---- single step, batch_size != 1 path (x carries a leading unit dim) ----
    x = jax.random.normal(k_x, (1, batch, x_dim), jnp.float32)
    r = jax.random.normal(k_r, (batch, r_dim), jnp.float32)
    out = mlp_controller_forward(x, r, wr, wx, bias2d,
                                 batch_size=batch, out_dim=out_dim)
    out = jax.block_until_ready(out)
    ref = jnp.concatenate([r, jnp.squeeze(x, 0)], axis=1) @ weight.T + bias
    assert out.shape == (batch, output_dim)
    assert jnp.allclose(out, ref, atol=1e-5, rtol=1e-5)

    # ---- single step, batch_size == 1 path (x has no leading unit dim) ----
    x1 = jax.random.normal(k_x1, (1, x_dim), jnp.float32)
    r1 = jax.random.normal(k_r1, (1, r_dim), jnp.float32)
    out1 = mlp_controller_forward(x1, r1, wr, wx, bias2d,
                                  batch_size=1, out_dim=out_dim)
    out1 = jax.block_until_ready(out1)
    ref1 = jnp.concatenate([r1, x1], axis=1) @ weight.T + bias
    assert out1.shape == (1, output_dim)
    assert jnp.allclose(out1, ref1, atol=1e-5, rtol=1e-5)

    # ---- fused across T timesteps: T*B flattened into M, single call ----
    x_seq = jax.random.normal(k_xs, (T, batch, x_dim), jnp.float32)
    r_seq = jax.random.normal(k_rs, (T, batch, r_dim), jnp.float32)
    out_seq = mlp_controller_forward_seq(x_seq, r_seq, wr, wx, bias2d,
                                         out_dim=out_dim)
    out_seq = jax.block_until_ready(out_seq)

    cat_seq = jnp.concatenate([r_seq, x_seq], axis=-1)        # (T, B, in_dim)
    ref_seq = jnp.einsum("tbi,oi->tbo", cat_seq, weight) + bias
    assert out_seq.shape == (T, batch, output_dim)
    assert jnp.allclose(out_seq, ref_seq, atol=1e-5, rtol=1e-5)

    # ---- same sequence through the M-tiled grid path (forced small tile) ----
    out_seq_t = mlp_controller_forward_seq(x_seq, r_seq, wr, wx, bias2d,
                                           out_dim=out_dim, tile_m=8)
    out_seq_t = jax.block_until_ready(out_seq_t)
    assert out_seq_t.shape == (T, batch, output_dim)
    assert jnp.allclose(out_seq_t, ref_seq, atol=1e-5, rtol=1e-5)

    print("KERNEL_OK")
</pallas_src>

<mosaic_0001>
module attributes {stable_mosaic.version = 11 : i64} {
  func.func @_mlp_controller_kernel(%arg0: memref<8x16xf32, #tpu.memory_space<vmem>>, %arg1: memref<8x16xf32, #tpu.memory_space<vmem>>, %arg2: memref<16x128xf32, #tpu.memory_space<vmem>>, %arg3: memref<16x128xf32, #tpu.memory_space<vmem>>, %arg4: memref<1x128xf32, #tpu.memory_space<vmem>>, %arg5: memref<8x128xf32, #tpu.memory_space<vmem>>) attributes {dimension_semantics = [], scalar_prefetch = 0 : i64, scratch_operands = 0 : i64, tpu.core_type = #tpu.core_type<tc>} {
    %c0 = arith.constant 0 : index
    %c0_0 = arith.constant 0 : index
    %0 = vector.load %arg0[%c0, %c0_0] : memref<8x16xf32, #tpu.memory_space<vmem>>, vector<8x16xf32>
    %c0_1 = arith.constant 0 : index
    %c0_2 = arith.constant 0 : index
    %1 = vector.load %arg2[%c0_1, %c0_2] : memref<16x128xf32, #tpu.memory_space<vmem>>, vector<16x128xf32>
    %cst = arith.constant dense<0.000000e+00> : vector<8x128xf32>
    %2 = tpu.matmul %0, %1, %cst {dimension_numbers = #tpu.dot_dimension_numbers<[1], [0], [0], [1], [0, 0, 1, 1], [], []>} : vector<8x16xf32>, vector<16x128xf32>, vector<8x128xf32> -> vector<8x128xf32>
    %c0_3 = arith.constant 0 : index
    %c0_4 = arith.constant 0 : index
    %3 = vector.load %arg1[%c0_3, %c0_4] : memref<8x16xf32, #tpu.memory_space<vmem>>, vector<8x16xf32>
    %c0_5 = arith.constant 0 : index
    %c0_6 = arith.constant 0 : index
    %4 = vector.load %arg3[%c0_5, %c0_6] : memref<16x128xf32, #tpu.memory_space<vmem>>, vector<16x128xf32>
    %cst_7 = arith.constant dense<0.000000e+00> : vector<8x128xf32>
    %5 = tpu.matmul %3, %4, %cst_7 {dimension_numbers = #tpu.dot_dimension_numbers<[1], [0], [0], [1], [0, 0, 1, 1], [], []>} : vector<8x16xf32>, vector<16x128xf32>, vector<8x128xf32> -> vector<8x128xf32>
    %6 = arith.addf %2, %5 : vector<8x128xf32>
    %c0_8 = arith.constant 0 : index
    %c0_9 = arith.constant 0 : index
    %7 = vector.load %arg4[%c0_8, %c0_9] : memref<1x128xf32, #tpu.memory_space<vmem>>, vector<1x128xf32>
    %8 = vector.broadcast %7 : vector<1x128xf32> to vector<8x128xf32>
    %9 = arith.addf %6, %8 : vector<8x128xf32>
    %c0_10 = arith.constant 0 : index
    %c0_11 = arith.constant 0 : index
    %10 = vector.load %arg5[%c0_10, %c0_11] : memref<8x128xf32, #tpu.memory_space<vmem>>, vector<8x128xf32>
    tpu.vector_store %arg5[%c0_10, %c0_11], %9 {strides = array<i32>} : memref<8x128xf32, #tpu.memory_space<vmem>>, vector<8x128xf32>,
    return
  }
}

</mosaic_0001>

<llo_original>
// kernel: tpu_custom_call.1
$region0: #{tpu_custom_call.1}
  #allocation0 [shape = 'u32[]', space=smem, size = 0x4, offset = 0x4, fixed_abs, tag = 'smem constant byte address 0x4 - core index']
  #allocation1 [shape = 'u32[72,128]{1,0:T(1,128)}', space=vmem, size = 0x9000, scoped, tag = 'internal scratch']
  %s0 = inlined_call_operand.hbm [shape: f32[8,16], index: 0, kind: input, shape index: {}]
  %s1 = inlined_call_operand.hbm [shape: f32[8,16], index: 1, kind: input, shape index: {}]
  %s2 = inlined_call_operand.hbm [shape: f32[16,128], index: 2, kind: input, shape index: {}]
  %s3 = inlined_call_operand.hbm [shape: f32[16,128], index: 3, kind: input, shape index: {}]
  %s4 = inlined_call_operand.vmem [shape: f32[1,128], index: 4, kind: input, shape index: {}]
  %s5 = inlined_call_operand.hbm [shape: f32[8,128], index: 5, kind: output, shape index: {}]
  %s6 = sld [smem:[#allocation0]]
  $region46: #{tpu_custom_call.1} parent=0
    _
  %s8 = ssub.s32 1, %s6
  %s9 = scalar_select 0, %s8, %s6
  $region1: #{tpu_custom_call.1} parent=0
    #allocation2 [shape = 'u8[4096]{0}', space=vmem, size = 0x1000, scoped, tag = 'input window, operand 0, single buffered']
    #allocation3 [shape = 's32[1]{0}', space=sflag, size = 0x4, scoped, tag = 'scoped memory for tpu_custom_call.1']
    #allocation4 [shape = 's32[1]{0}', space=sflag, size = 0x4, scoped, tag = 'scoped memory for tpu_custom_call.1']
    #allocation5 [shape = 'u8[4096]{0}', space=vmem, size = 0x1000, scoped, tag = 'input window, operand 1, single buffered']
    #allocation6 [shape = 's32[1]{0}', space=sflag, size = 0x4, scoped, tag = 'scoped memory for tpu_custom_call.1']
    #allocation7 [shape = 'u8[8192]{0}', space=vmem, size = 0x2000, scoped, tag = 'input window, operand 2, single buffered']
    #allocation8 [shape = 'u8[8192]{0}', space=vmem, size = 0x2000, scoped, tag = 'input window, operand 3, single buffered']
    #allocation9 [shape = 's32[1]{0}', space=sflag, size = 0x4, scoped, tag = 'scoped memory for tpu_custom_call.1']
    #allocation10 [shape = 'u8[4096]{0}', space=vmem, size = 0x1000, scoped, tag = 'output window, operand 0, single buffered']
    %10 = vsyncpa [#allocation3], 0
    %11 = vsyncpa [#allocation6], 0
    %12 = vsyncpa [#allocation9], 0
    %13 = vsyncpa [#allocation4], 0
    // Predicated region
    $region2: #{tpu_custom_call.1} parent=1 // pred_check
      _
    $region3: #{tpu_custom_call.1} parent=1 // pred_check_branch
      %15 = sbr.rel (0) target = $region5
    $region4: #{tpu_custom_call.1} parent=1 // pred_region
      %17 = vsyncadd [#allocation3], 0
      %s19 = sshll.u32 %s0, 4
      %s20 = int_to_ptr.hbm [resolvable:$true] %s19
      %s21 = sshll.u32 [#allocation2], 4
      %s22 = int_to_ptr.vmem [resolvable:$true] %s21
      %24 = dma.hbm_to_vmem [thread:$0]  %s20, 128, %s22, [#allocation3]
    $region5: #{tpu_custom_call.1} parent=1 // pred_fallthru
      _
    // Predicated region
    $region6: #{tpu_custom_call.1} parent=1 // pred_check
      _
    $region7: #{tpu_custom_call.1} parent=1 // pred_check_branch
      %26 = sbr.rel (0) target = $region9
    $region8: #{tpu_custom_call.1} parent=1 // pred_region
      %28 = vsyncadd [#allocation6], 0
      %s30 = sshll.u32 %s1, 4
      %s31 = int_to_ptr.hbm [resolvable:$true] %s30
      %s32 = sshll.u32 [#allocation5], 4
      %s33 = int_to_ptr.vmem [resolvable:$true] %s32
      %35 = dma.hbm_to_vmem [thread:$0]  %s31, 128, %s33, [#allocation6]
    $region9: #{tpu_custom_call.1} parent=1 // pred_fallthru
      _
    // Predicated region
    $region10: #{tpu_custom_call.1} parent=1 // pred_check
      _
    $region11: #{tpu_custom_call.1} parent=1 // pred_check_branch
      %37 = sbr.rel (0) target = $region13
    $region12: #{tpu_custom_call.1} parent=1 // pred_region
      %39 = vsyncadd [#allocation6], 0
      %s40 = sshll.u32 %s2, 4
      %s41 = int_to_ptr.hbm [resolvable:$true] %s40
      %s42 = sshll.u32 [#allocation7], 4
      %s43 = int_to_ptr.vmem [resolvable:$true] %s42
      %48 = dma.hbm_to_vmem [thread:$0]  %s41, 256, %s43, [#allocation6], 128, 128, 8
    $region13: #{tpu_custom_call.1} parent=1 // pred_fallthru
      _
    // Predicated region
    $region14: #{tpu_custom_call.1} parent=1 // pred_check
      _
    $region15: #{tpu_custom_call.1} parent=1 // pred_check_branch
      %50 = sbr.rel (0) target = $region17
    $region16: #{tpu_custom_call.1} parent=1 // pred_region
      %52 = vsyncadd [#allocation9], 0
      %s53 = sshll.u32 %s3, 4
      %s54 = int_to_ptr.hbm [resolvable:$true] %s53
      %s55 = sshll.u32 [#allocation8], 4
      %s56 = int_to_ptr.vmem [resolvable:$true] %s55
      %61 = dma.hbm_to_vmem [thread:$0]  %s54, 256, %s56, [#allocation9], 128, 128, 8
    $region17: #{tpu_custom_call.1} parent=1 // pred_fallthru
      _
    // Predicated region
    $region18: #{tpu_custom_call.1} parent=1 // pred_check
      _
    $region19: #{tpu_custom_call.1} parent=1 // pred_check_branch
      %63 = sbr.rel (0) target = $region21
    $region20: #{tpu_custom_call.1} parent=1 // pred_region
      _
    $region21: #{tpu_custom_call.1} parent=1 // pred_fallthru
      _
    // Predicated region
    $region22: #{tpu_custom_call.1} parent=1 // pred_check
      _
    $region23: #{tpu_custom_call.1} parent=1 // pred_check_branch
      %65 = sbr.rel (0) target = $region25
    $region24: #{tpu_custom_call.1} parent=1 // pred_region
      %67 = dma.done [#allocation3], 128
    $region25: #{tpu_custom_call.1} parent=1 // pred_fallthru
      _
    // Predicated region
    $region26: #{tpu_custom_call.1} parent=1 // pred_check
      _
    $region27: #{tpu_custom_call.1} parent=1 // pred_check_branch
      %69 = sbr.rel (0) target = $region29
    $region28: #{tpu_custom_call.1} parent=1 // pred_region
      %71 = dma.done [#allocation6], 128
    $region29: #{tpu_custom_call.1} parent=1 // pred_fallthru
      _
    // Predicated region
    $region30: #{tpu_custom_call.1} parent=1 // pred_check
      _
    $region31: #{tpu_custom_call.1} parent=1 // pred_check_branch
      %73 = sbr.rel (0) target = $region33
    $region32: #{tpu_custom_call.1} parent=1 // pred_region
      %75 = dma.done [#allocation6], 256
    $region33: #{tpu_custom_call.1} parent=1 // pred_fallthru
      _
    // Predicated region
    $region34: #{tpu_custom_call.1} parent=1 // pred_check
      _
    $region35: #{tpu_custom_call.1} parent=1 // pred_check_branch
      %77 = sbr.rel (0) target = $region37
    $region36: #{tpu_custom_call.1} parent=1 // pred_region
      %79 = dma.done [#allocation9], 256
    $region37: #{tpu_custom_call.1} parent=1 // pred_fallthru
      _
    %v80 = vld [vmem:[#allocation2] sm:$0xff]
    %v81 = vld [vmem:[#allocation7] sm:$0xff]
    %v82 = vld [vmem:[#allocation7 + $0x8] sm:$0xff]
    %v83 = vld [vmem:[#allocation5] sm:$0xff]
    %v84 = vld [vmem:[#allocation8] sm:$0xff]
    %v85 = vld [vmem:[#allocation8 + $0x8] sm:$0xff]
    %vm86 = vcmask 130048
    %v88 = vsel %vm86, %v83, 0
    %90 = vmatpush.msra.mxu0 0.0
    %91 = vmatpush.msra.mxu0 0.0
    %92 = vmatpush.msra.mxu0 0.0
    %93 = vmatpush.msra.mxu0 0.0
    %94 = vmatpush.msra.mxu0 0.0
    %95 = vmatpush.msra.mxu0 0.0
    %96 = vmatpush.msra.mxu0 0.0
    %97 = vmatpush.msra.mxu0 0.0
    %98 = vmatpush.msra.mxu0 0.0
    %99 = vmatpush.msra.mxu0 0.0
    %100 = vmatpush.msra.mxu0 0.0
    %101 = vmatpush.msra.mxu0 0.0
    %102 = vmatpush.msra.mxu0 0.0
    %103 = vmatpush.msra.mxu0 0.0
    %104 = vmatpush.msra.mxu0 %v85
    %105 = vmatpush.msra.mxu0 %v84
    %106 = vmatmul.f32.gmra.mxu0 %v88
    %v107 = vpop.f32.mrf.mxu0
    %v108 = vadd.f32 0.0, %v107
    %109 = vdwg.mxu0
    %v111 = vsel %vm86, %v80, 0
    %113 = vmatpush.msra.mxu0 0.0
    %114 = vmatpush.msra.mxu0 0.0
    %115 = vmatpush.msra.mxu0 0.0
    %116 = vmatpush.msra.mxu0 0.0
    %117 = vmatpush.msra.mxu0 0.0
    %118 = vmatpush.msra.mxu0 0.0
    %119 = vmatpush.msra.mxu0 0.0
    %120 = vmatpush.msra.mxu0 0.0
    %121 = vmatpush.msra.mxu0 0.0
    %122 = vmatpush.msra.mxu0 0.0
    %123 = vmatpush.msra.mxu0 0.0
    %124 = vmatpush.msra.mxu0 0.0
    %125 = vmatpush.msra.mxu0 0.0
    %126 = vmatpush.msra.mxu0 0.0
    %127 = vmatpush.msra.mxu0 %v82
    %128 = vmatpush.msra.mxu0 %v81
    %129 = vmatmul.f32.gmra.mxu0 %v111
    %v130 = vpop.f32.mrf.mxu0
    %v131 = vadd.f32 %v108, %v130
    %132 = vdwg.mxu0
    %v133 = vld [vmem:[%s4] sm:$0x1]
    %v135 = vperm.slane %v133, 0
    %v137 = vadd.f32 %v131, %v135
    %138 = vst [vmem:[#allocation10] sm:$0xff] %v137
    // Predicated region
    $region38: #{tpu_custom_call.1} parent=1 // pred_check
      _
    $region39: #{tpu_custom_call.1} parent=1 // pred_check_branch
      %140 = sbr.rel (0) target = $region41
    $region40: #{tpu_custom_call.1} parent=1 // pred_region
      %142 = vsyncadd [#allocation4], 0
      %s144 = sshll.u32 [#allocation10], 4
      %s145 = int_to_ptr.vmem [resolvable:$true] %s144
      %s146 = sshll.u32 %s5, 4
      %s147 = int_to_ptr.hbm [resolvable:$true] %s146
      %149 = dma.vmem_to_hbm [thread:$0]  %s145, 128, %s147, [#allocation4]
    $region41: #{tpu_custom_call.1} parent=1 // pred_fallthru
      _
    // Predicated region
    $region42: #{tpu_custom_call.1} parent=1 // pred_check
      _
    $region43: #{tpu_custom_call.1} parent=1 // pred_check_branch
      %151 = sbr.rel (0) target = $region45
    $region44: #{tpu_custom_call.1} parent=1 // pred_region
      %153 = dma.done [#allocation4], 128
    $region45: #{tpu_custom_call.1} parent=1 // pred_fallthru
      _
    %154 = vsyncpa [#allocation3], 1
    %155 = vsyncpa [#allocation6], 1
    %156 = vsyncpa [#allocation9], 1
    %157 = vsyncpa [#allocation4], 1

</llo_original>
